<compile_context>
chip_gen: v6e
topology: v6e:2x2x1
jax: 0.10.0
libtpu: 0.0.40
codegen_flags: <defaults>
</compile_context>

<pallas_src>
import functools

import jax
import jax.numpy as jnp
from jax.experimental import pallas as pl
from jax.experimental.pallas import tpu as pltpu

EPS = 1e-5
_LANE = 128


def _vmem_capacity_bytes():
    """Physical VMEM per core; conservative fallback if the query fails."""
    try:
        info = pltpu.get_tpu_info()
        for attr in ("vmem_capacity_bytes", "vmem_bytes", "vmem_size_bytes"):
            val = getattr(info, attr, None)
            if val:
                return int(val)
    except Exception:
        pass
    return 64 * 1024 * 1024      # v7x per-TC size == smallest current generation


_VMEM_CAPACITY = _vmem_capacity_bytes()
# Scoped-VMEM limit with headroom: 96 MiB on 128-MiB v5e/v6e, 48 MiB on 64-MiB v7x.
_VMEM_LIMIT_BYTES = min((_VMEM_CAPACITY // 4) * 3, 96 * 1024 * 1024)
# Per-x-block budget: affine pass holds double-buffered x + y (= 4 blocks) and the
# stats pass holds x + f32 temps, so /8 leaves room (12 MiB v5e/v6e, 6 MiB v7x).
_BLOCK_BYTES_BUDGET = _VMEM_LIMIT_BYTES // 8
# Whole-tensor-resident fused path threshold (x + y + f32 temps ~ a few x bytes).
_FUSED_BYTES_MAX = _VMEM_LIMIT_BYTES // 6


# --------------------------------------------------------------------------- #
# Fused path: whole x resident in VMEM, single kernel (1 HBM read + 1 write). #
# --------------------------------------------------------------------------- #
def _fused_kernel(x_ref, a0_ref, bg_ref, bb_ref, o_ref, *, count):
    x = x_ref[...].astype(jnp.float32)                                # (N, C, L)
    s = jnp.sum(jnp.sum(x, axis=2, keepdims=True), axis=0, keepdims=True)      # (1,C,1)
    sq = jnp.sum(jnp.sum(x * x, axis=2, keepdims=True), axis=0, keepdims=True)
    inv_count = 1.0 / count
    mean = s * inv_count
    var = jnp.maximum(sq * inv_count - mean * mean, 0.0)
    inv_std = jax.lax.rsqrt(var + EPS)                                # EUP
    g = bg_ref[...] * inv_std                                         # beta*gamma/std
    a = a0_ref[...] + g                                               # alpha + beta*gamma/std
    b = bb_ref[...] - g * mean                                        # beta*bias - g*mean
    o_ref[...] = (a * x + b).astype(o_ref.dtype)


@jax.jit
def _fused_impl(x, gamma, bias, alpha, beta):
    n, c, l = x.shape
    alpha_s = jnp.asarray(alpha, jnp.float32).reshape(())
    beta_s = jnp.asarray(beta, jnp.float32).reshape(())
    a0 = jnp.broadcast_to(alpha_s, (1, c, 1)).astype(jnp.float32)
    bg = (beta_s * jnp.asarray(gamma, jnp.float32).reshape(c)).reshape(1, c, 1)
    bb = (beta_s * jnp.asarray(bias, jnp.float32).reshape(c)).reshape(1, c, 1)
    return pl.pallas_call(
        functools.partial(_fused_kernel, count=float(n * l)),
        out_shape=jax.ShapeDtypeStruct((n, c, l), x.dtype),
        compiler_params=pltpu.CompilerParams(vmem_limit_bytes=_VMEM_LIMIT_BYTES),
        cost_estimate=pl.CostEstimate(flops=5 * n * c * l, transcendentals=c,
                                      bytes_accessed=2 * n * c * l * x.dtype.itemsize),
    )(x, a0, bg, bb)


# --------------------------------------------------------------------------- #
# Two-pass tiled path over (N*C, L): stats pass + per-row affine pass.        #
# --------------------------------------------------------------------------- #
def _stats_kernel(x_ref, sum_ref, sq_ref, *, block_l, length, num_tiles):
    """Per-tile, per-(n,c)-row partial sum and sum-of-squares (f32 accumulation)."""
    x = x_ref[...].astype(jnp.float32)                                # (NC, TL)

    def emit(xv):
        sum_ref[...] = jnp.sum(xv, axis=1, keepdims=True).reshape(sum_ref.shape)
        sq_ref[...] = jnp.sum(xv * xv, axis=1, keepdims=True).reshape(sq_ref.shape)

    if length % block_l != 0:          # static: only lower the mask when there is a tail
        last = num_tiles - 1

        @pl.when(pl.program_id(0) != last)
        def _():                       # interior tiles: no mask work
            emit(x)

        @pl.when(pl.program_id(0) == last)
        def _():                       # tail tile: zero out padding lanes
            lane = jax.lax.broadcasted_iota(jnp.int32, x.shape, 1)
            emit(jnp.where(lane < (length - last * block_l), x, 0.0))
    else:
        emit(x)


def _affine_kernel(x_ref, a_ref, b_ref, o_ref):
    """y = a_row * x + b_row  (BN + alpha/beta folded into one per-row FMA)."""
    x = x_ref[...].astype(jnp.float32)                                # (NC, TL)
    o_ref[...] = (a_ref[...] * x + b_ref[...]).astype(o_ref.dtype)


@functools.partial(jax.jit, static_argnames=("tl",))
def _tiled_impl(x, gamma, bias, alpha, beta, tl):
    n, c, l = x.shape
    nc = n * c
    x2 = x.reshape(nc, l)              # free: x is contiguous in NCL layout
    num_tiles = pl.cdiv(l, tl)

    cparams = pltpu.CompilerParams(
        dimension_semantics=("parallel",),      # independent L tiles -> megacore on v7x
        vmem_limit_bytes=_VMEM_LIMIT_BYTES,
    )

    # ---- pass 1: per-row partial sum / sum-of-squares (tiny outputs) --------
    part_shape = jax.ShapeDtypeStruct((num_tiles, nc, 1), jnp.float32)
    sums, sqs = pl.pallas_call(
        functools.partial(_stats_kernel, block_l=tl, length=l, num_tiles=num_tiles),
        out_shape=(part_shape, part_shape),
        grid=(num_tiles,),
        in_specs=[pl.BlockSpec((nc, tl), lambda t: (0, t))],
        out_specs=(pl.BlockSpec((1, nc, 1), lambda t: (t, 0, 0)),
                   pl.BlockSpec((1, nc, 1), lambda t: (t, 0, 0))),
        compiler_params=cparams,
        cost_estimate=pl.CostEstimate(flops=3 * nc * l, transcendentals=0,
                                      bytes_accessed=nc * l * x.dtype.itemsize),
    )(x2)

    # ---- tiny JAX glue: finish reduction, fold BN + alpha/beta into one FMA --
    count = n * l
    row_sum = jnp.sum(sums, axis=0)[:, 0].reshape(n, c)
    row_sq = jnp.sum(sqs, axis=0)[:, 0].reshape(n, c)
    mean = jnp.sum(row_sum, axis=0) / count                           # (C,)
    var = jnp.maximum(jnp.sum(row_sq, axis=0) / count - mean * mean, 0.0)
    inv_std = jax.lax.rsqrt(var + EPS)

    gamma_f = jnp.asarray(gamma, jnp.float32).reshape(c)
    bias_f = jnp.asarray(bias, jnp.float32).reshape(c)
    alpha_s = jnp.asarray(alpha, jnp.float32).reshape(())
    beta_s = jnp.asarray(beta, jnp.float32).reshape(())

    g = beta_s * gamma_f * inv_std
    a_c = alpha_s + g                                                 # per-channel scale
    b_c = beta_s * bias_f - g * mean                                  # per-channel shift
    a_nc = jnp.tile(a_c, n).reshape(nc, 1)                            # row n*C + c -> channel c
    b_nc = jnp.tile(b_c, n).reshape(nc, 1)

    # ---- pass 2: lane-dense, pipelined per-row FMA ---------------------------
    y2 = pl.pallas_call(
        _affine_kernel,
        out_shape=jax.ShapeDtypeStruct((nc, l), x.dtype),
        grid=(num_tiles,),
        in_specs=[pl.BlockSpec((nc, tl), lambda t: (0, t)),
                  pl.BlockSpec((nc, 1), lambda t: (0, 0)),
                  pl.BlockSpec((nc, 1), lambda t: (0, 0))],
        out_specs=pl.BlockSpec((nc, tl), lambda t: (0, t)),
        compiler_params=cparams,
        cost_estimate=pl.CostEstimate(flops=2 * nc * l, transcendentals=0,
                                      bytes_accessed=2 * nc * l * x.dtype.itemsize),
    )(x2, a_nc, b_nc)
    return y2.reshape(n, c, l)


def _choose_block_l(n_rows, l, elem_bytes):
    """Largest lane tile (multiple of 128) within the per-block byte budget;
    when L fits a single block, still split into >=2 tiles so both v7x TCs work."""
    bytes_per_lane = max(1, n_rows * elem_bytes)
    budget_lanes = max(_LANE, (_BLOCK_BYTES_BUDGET // bytes_per_lane) // _LANE * _LANE)
    if l > budget_lanes:
        return budget_lanes
    if l >= 2 * _LANE:
        return pl.cdiv(pl.cdiv(l, 2), _LANE) * _LANE
    return l


def adaptive_batch_norm_1d(x, bn_weight, bn_bias, alpha, beta,
                           block_l=None, force_two_pass=False):
    """x: (N, C, L).  Returns alpha * x + beta * batch_norm(x) (training mode)."""
    n, c, l = x.shape
    elem_bytes = jnp.dtype(x.dtype).itemsize
    if (not force_two_pass and block_l is None
            and n * c * l * max(elem_bytes, 4) <= _FUSED_BYTES_MAX):
        return _fused_impl(x, bn_weight, bn_bias, alpha, beta)
    tl = block_l if block_l is not None else _choose_block_l(n * c, l, elem_bytes)
    return _tiled_impl(x, bn_weight, bn_bias, alpha, beta, tl=tl)


def reference(x, bn_weight, bn_bias, alpha, beta):
    """Pure-JAX reference replicating PyTorch training-mode BatchNorm1d."""
    mean = jnp.mean(x, axis=(0, 2), keepdims=True)
    var = jnp.mean((x - mean) ** 2, axis=(0, 2), keepdims=True)
    norm = (x - mean) / jnp.sqrt(var + EPS)
    norm = norm * bn_weight.reshape(1, -1, 1) + bn_bias.reshape(1, -1, 1)
    return alpha * x + beta * norm


if __name__ == "__main__":
    key = jax.random.PRNGKey(0)

    # Small shapes consistent with the module's (batch, channels, length) use.
    n, c, l = 2, 4, 16
    x = jax.random.normal(key, (n, c, l), dtype=jnp.float32)

    # Parameters exactly as AdaptiveBatchNorm1d.__init__ creates them.
    bn_weight = jnp.ones((c,), jnp.float32)
    bn_bias = jnp.zeros((c,), jnp.float32)
    alpha = jnp.array([1.0], jnp.float32)
    beta = jnp.array([0.0], jnp.float32)

    y = adaptive_batch_norm_1d(x, bn_weight, bn_bias, alpha, beta)       # fused path
    jax.block_until_ready(y)
    assert jnp.allclose(y, reference(x, bn_weight, bn_bias, alpha, beta),
                        atol=1e-5, rtol=1e-5)

    # Non-default, deterministic parameters (still the fused path).
    k1, k2, k3, k4 = jax.random.split(jax.random.PRNGKey(1), 4)
    bn_w2 = jax.random.normal(k1, (c,), jnp.float32)
    bn_b2 = jax.random.normal(k2, (c,), jnp.float32)
    a2 = jax.random.normal(k3, (1,), jnp.float32)
    b2 = jax.random.normal(k4, (1,), jnp.float32)
    y2 = adaptive_batch_norm_1d(x, bn_w2, bn_b2, a2, b2)
    jax.block_until_ready(y2)
    assert jnp.allclose(y2, reference(x, bn_w2, bn_b2, a2, b2),
                        atol=1e-5, rtol=1e-5)

    # Two-pass path with an explicit 128-lane tile and a masked L tail.
    n3, c3, l3 = 2, 8, 300
    x3 = jax.random.normal(jax.random.PRNGKey(2), (n3, c3, l3), jnp.float32)
    bn_w3 = jnp.full((c3,), 0.5, jnp.float32)
    bn_b3 = jnp.full((c3,), 0.25, jnp.float32)
    a3 = jnp.array([0.7], jnp.float32)
    b3 = jnp.array([0.3], jnp.float32)
    y3 = adaptive_batch_norm_1d(x3, bn_w3, bn_b3, a3, b3, block_l=128)
    jax.block_until_ready(y3)
    assert jnp.allclose(y3, reference(x3, bn_w3, bn_b3, a3, b3),
                        atol=1e-5, rtol=1e-5)

    # Auto-sized two-pass path: >= 2 parallel lane-aligned tiles, exact tiling.
    n4, c4, l4 = 2, 8, 1024
    x4 = jax.random.normal(jax.random.PRNGKey(3), (n4, c4, l4), jnp.float32)
    y4 = adaptive_batch_norm_1d(x4, bn_w3, bn_b3, a3, b3, force_two_pass=True)
    jax.block_until_ready(y4)
    assert jnp.allclose(y4, reference(x4, bn_w3, bn_b3, a3, b3),
                        atol=1e-5, rtol=1e-5)

    print("KERNEL_OK")
</pallas_src>

<mosaic_0001>
module attributes {stable_mosaic.version = 11 : i64} {
  func.func @_fused_kernel(%arg0: memref<2x4x16xf32, #tpu.memory_space<vmem>>, %arg1: memref<1x4x1xf32, #tpu.memory_space<vmem>>, %arg2: memref<1x4x1xf32, #tpu.memory_space<vmem>>, %arg3: memref<1x4x1xf32, #tpu.memory_space<vmem>>, %arg4: memref<2x4x16xf32, #tpu.memory_space<vmem>>) attributes {dimension_semantics = [], scalar_prefetch = 0 : i64, scratch_operands = 0 : i64, tpu.core_type = #tpu.core_type<tc>} {
    %c0 = arith.constant 0 : index
    %c0_0 = arith.constant 0 : index
    %c0_1 = arith.constant 0 : index
    %0 = vector.load %arg0[%c0, %c0_0, %c0_1] : memref<2x4x16xf32, #tpu.memory_space<vmem>>, vector<2x4x16xf32>
    %cst = arith.constant dense<0.000000e+00> : vector<2x4xf32>
    %1 = vector.multi_reduction <add>, %0, %cst [2] : vector<2x4x16xf32> to vector<2x4xf32>
    %2 = vector.shape_cast %1 : vector<2x4xf32> to vector<2x4x1xf32>
    %cst_2 = arith.constant dense<0.000000e+00> : vector<4x1xf32>
    %3 = vector.multi_reduction <add>, %2, %cst_2 [0] : vector<2x4x1xf32> to vector<4x1xf32>
    %4 = vector.shape_cast %3 : vector<4x1xf32> to vector<1x4x1xf32>
    %5 = arith.mulf %0, %0 : vector<2x4x16xf32>
    %cst_3 = arith.constant dense<0.000000e+00> : vector<2x4xf32>
    %6 = vector.multi_reduction <add>, %5, %cst_3 [2] : vector<2x4x16xf32> to vector<2x4xf32>
    %7 = vector.shape_cast %6 : vector<2x4xf32> to vector<2x4x1xf32>
    %cst_4 = arith.constant dense<0.000000e+00> : vector<4x1xf32>
    %8 = vector.multi_reduction <add>, %7, %cst_4 [0] : vector<2x4x1xf32> to vector<4x1xf32>
    %9 = vector.shape_cast %8 : vector<4x1xf32> to vector<1x4x1xf32>
    %cst_5 = arith.constant 3.125000e-02 : f32
    %10 = vector.broadcast %cst_5 : f32 to vector<1x4x1xf32>
    %11 = arith.mulf %4, %10 : vector<1x4x1xf32>
    %cst_6 = arith.constant 3.125000e-02 : f32
    %12 = vector.broadcast %cst_6 : f32 to vector<1x4x1xf32>
    %13 = arith.mulf %9, %12 : vector<1x4x1xf32>
    %14 = arith.mulf %11, %11 : vector<1x4x1xf32>
    %15 = arith.subf %13, %14 : vector<1x4x1xf32>
    %cst_7 = arith.constant 0.000000e+00 : f32
    %16 = vector.broadcast %cst_7 : f32 to vector<1x4x1xf32>
    %17 = arith.maximumf %15, %16 : vector<1x4x1xf32>
    %cst_8 = arith.constant 9.99999974E-6 : f32
    %18 = vector.broadcast %cst_8 : f32 to vector<1x4x1xf32>
    %19 = arith.addf %17, %18 : vector<1x4x1xf32>
    %20 = math.rsqrt %19 : vector<1x4x1xf32>
    %c0_9 = arith.constant 0 : index
    %c0_10 = arith.constant 0 : index
    %c0_11 = arith.constant 0 : index
    %21 = vector.load %arg2[%c0_9, %c0_10, %c0_11] : memref<1x4x1xf32, #tpu.memory_space<vmem>>, vector<1x4x1xf32>
    %22 = arith.mulf %21, %20 : vector<1x4x1xf32>
    %c0_12 = arith.constant 0 : index
    %c0_13 = arith.constant 0 : index
    %c0_14 = arith.constant 0 : index
    %23 = vector.load %arg1[%c0_12, %c0_13, %c0_14] : memref<1x4x1xf32, #tpu.memory_space<vmem>>, vector<1x4x1xf32>
    %24 = arith.addf %23, %22 : vector<1x4x1xf32>
    %c0_15 = arith.constant 0 : index
    %c0_16 = arith.constant 0 : index
    %c0_17 = arith.constant 0 : index
    %25 = vector.load %arg3[%c0_15, %c0_16, %c0_17] : memref<1x4x1xf32, #tpu.memory_space<vmem>>, vector<1x4x1xf32>
    %26 = arith.mulf %22, %11 : vector<1x4x1xf32>
    %27 = arith.subf %25, %26 : vector<1x4x1xf32>
    %28 = vector.broadcast %24 : vector<1x4x1xf32> to vector<2x4x16xf32>
    %29 = arith.mulf %28, %0 : vector<2x4x16xf32>
    %30 = vector.broadcast %27 : vector<1x4x1xf32> to vector<2x4x16xf32>
    %31 = arith.addf %29, %30 : vector<2x4x16xf32>
    %c0_18 = arith.constant 0 : index
    %c0_19 = arith.constant 0 : index
    %c0_20 = arith.constant 0 : index
    %32 = vector.load %arg4[%c0_18, %c0_19, %c0_20] : memref<2x4x16xf32, #tpu.memory_space<vmem>>, vector<2x4x16xf32>
    tpu.vector_store %arg4[%c0_18, %c0_19, %c0_20], %31 {strides = array<i32>} : memref<2x4x16xf32, #tpu.memory_space<vmem>>, vector<2x4x16xf32>,
    return
  }
}

</mosaic_0001>

<llo_original>
// kernel: _fused_impl.1
$region0: #{_fused_impl.1}
  #allocation0 [shape = 'u32[]', space=smem, size = 0x4, offset = 0x4, fixed_abs, tag = 'smem constant byte address 0x4 - core index']
  #allocation1 [shape = 'u32[144,128]{1,0:T(1,128)}', space=vmem, size = 0x12000, scoped, tag = 'internal scratch']
  %s0 = inlined_call_operand.vmem [shape: f32[2,4,16], index: 0, kind: input, shape index: {}]
  %s1 = inlined_call_operand.vmem [shape: f32[1,4,1], index: 1, kind: input, shape index: {}]
  %s2 = inlined_call_operand.vmem [shape: f32[1,4,1], index: 2, kind: input, shape index: {}]
  %s3 = inlined_call_operand.vmem [shape: f32[1,4,1], index: 3, kind: input, shape index: {}]
  %s4 = inlined_call_operand.hbm [shape: f32[2,4,16], index: 4, kind: output, shape index: {}]
  %s5 = sld [smem:[#allocation0]]
  $region26: #{_fused_impl.1} parent=0
    _
  %s7 = ssub.s32 1, %s5
  %s8 = scalar_select 0, %s7, %s5
  $region1: #{_fused_impl.1} parent=0
    #allocation2 [shape = 'u8[4096]{0}', space=vmem, size = 0x1000, scoped, tag = 'output window, operand 0, single buffered']
    #allocation3 [shape = 's32[1]{0}', space=sflag, size = 0x4, scoped, tag = 'scoped memory for _fused_impl.1']
    %9 = vsyncpa [#allocation3], 0
    // Predicated region
    $region2: #{_fused_impl.1} parent=1 // pred_check
      _
    $region3: #{_fused_impl.1} parent=1 // pred_check_branch
      %11 = sbr.rel (0) target = $region5
    $region4: #{_fused_impl.1} parent=1 // pred_region
      _
    $region5: #{_fused_impl.1} parent=1 // pred_fallthru
      _
    // Predicated region
    $region6: #{_fused_impl.1} parent=1 // pred_check
      _
    $region7: #{_fused_impl.1} parent=1 // pred_check_branch
      %13 = sbr.rel (0) target = $region9
    $region8: #{_fused_impl.1} parent=1 // pred_region
      _
    $region9: #{_fused_impl.1} parent=1 // pred_fallthru
      _
    // Predicated region
    $region10: #{_fused_impl.1} parent=1 // pred_check
      _
    $region11: #{_fused_impl.1} parent=1 // pred_check_branch
      %15 = sbr.rel (0) target = $region13
    $region12: #{_fused_impl.1} parent=1 // pred_region
      _
    $region13: #{_fused_impl.1} parent=1 // pred_fallthru
      _
    // Predicated region
    $region14: #{_fused_impl.1} parent=1 // pred_check
      _
    $region15: #{_fused_impl.1} parent=1 // pred_check_branch
      %17 = sbr.rel (0) target = $region17
    $region16: #{_fused_impl.1} parent=1 // pred_region
      _
    $region17: #{_fused_impl.1} parent=1 // pred_fallthru
      _
    %v18 = vld [vmem:[%s0] sm:$0xf]
    %v19 = vld [vmem:[%s0 + $0x4] sm:$0xf]
    %vm20 = vcmask 125952
    %v21 = vsel %vm20, %v18, 0.0
    %22 = vadd.xlane.f32.xlu0 %v21
    %v23 = vpop.xlane.xlu0 %22
    %v24 = vsel %vm20, %v19, 0.0
    %25 = vadd.xlane.f32.xlu0 %v24
    %v26 = vpop.xlane.xlu0 %25
    %vm27 = vcmask 1043456
    %v28 = vsel %vm27, %v23, 0.0
    %v29 = vsel %vm27, %v26, 0.0
    %v30 = vadd.f32 %v28, %v29
    %v31 = vmul.f32 %v18, %v18
    %v32 = vmul.f32 %v19, %v19
    %v33 = vsel %vm20, %v31, 0.0
    %34 = vadd.xlane.f32.xlu0 %v33
    %v35 = vpop.xlane.xlu0 %34
    %v36 = vsel %vm20, %v32, 0.0
    %37 = vadd.xlane.f32.xlu0 %v36
    %v38 = vpop.xlane.xlu0 %37
    %v39 = vsel %vm27, %v35, 0.0
    %v40 = vsel %vm27, %v38, 0.0
    %v41 = vadd.f32 %v39, %v40
    %v42 = vmul.f32 %v30, 0.03125
    %v43 = vmul.f32 %v41, 0.03125
    %v44 = vmul.f32 %v42, %v42
    %v45 = vsub.f32 %v43, %v44
    %v46 = vmax.f32 %v45, 0.0
    %v47 = vadd.f32 %v46, 1e-05
    %v48 = vrsqrt.pop %v47
    %v49 = vld [vmem:[%s2] sm:$0xf]
    %v50 = vmul.f32 %v49, %v48
    %v51 = vld [vmem:[%s1] sm:$0xf]
    %v52 = vadd.f32 %v51, %v50
    %v53 = vld [vmem:[%s3] sm:$0xf]
    %v54 = vmul.f32 %v50, %v42
    %v55 = vsub.f32 %v53, %v54
    %57 = vset.pattern.permute.xlu0 0
    %58 = vperm.xlu0 %57, %v52
    %v59 = vpop.permute.xlu0 %58
    %v61 = vmul.f32 %v59, %v18
    %v62 = vmul.f32 %v59, %v19
    %64 = vset.pattern.permute.xlu0 0
    %65 = vperm.xlu0 %64, %v55
    %v66 = vpop.permute.xlu0 %65
    %v68 = vadd.f32 %v61, %v66
    %v69 = vadd.f32 %v62, %v66
    %70 = vst.msk [vmem:[#allocation2] sm:$0xf] %vm20, %v68
    %71 = vst.msk [vmem:[#allocation2 + $0x4] sm:$0xf] %vm20, %v69
    // Predicated region
    $region18: #{_fused_impl.1} parent=1 // pred_check
      _
    $region19: #{_fused_impl.1} parent=1 // pred_check_branch
      %73 = sbr.rel (0) target = $region21
    $region20: #{_fused_impl.1} parent=1 // pred_region
      %s75 = ssub.s32 128, 128
      %76 = vsyncadd [#allocation3], %s75
      %s77 = sshll.u32 [#allocation2], 4
      %s78 = int_to_ptr.vmem [resolvable:$true] %s77
      %83 = dma.vmem_to_hbm [thread:$0]  %s78, 128, %s4, [#allocation3], 64, 64, 4
    $region21: #{_fused_impl.1} parent=1 // pred_fallthru
      _
    // Predicated region
    $region22: #{_fused_impl.1} parent=1 // pred_check
      _
    $region23: #{_fused_impl.1} parent=1 // pred_check_branch
      %85 = sbr.rel (0) target = $region25
    $region24: #{_fused_impl.1} parent=1 // pred_region
      %86 = dma.done [#allocation3], 128
    $region25: #{_fused_impl.1} parent=1 // pred_fallthru
      _
    %87 = vsyncpa [#allocation3], 1

</llo_original>
